<compile_context>
chip_gen: v7x
topology: tpu7x:2x2x1
jax: 0.10.0
libtpu: 0.0.40
codegen_flags: <defaults>
</compile_context>

<pallas_src>
import jax
import jax.numpy as jnp
from jax import lax
from jax.experimental import pallas as pl
from jax.experimental.pallas import tpu as pltpu

# ----------------------------- model config ---------------------------------
B = 2            # batch
S = 8            # seq_len
D = 32           # dim
N_HEADS = 4
N_KV = 2
HEAD_DIM = 8
HIDDEN = 64      # ffn hidden_dim
EPS = 1e-5
GROUPS = N_HEADS // N_KV
SCALE = float(HEAD_DIM) ** 0.5

QW = N_HEADS * HEAD_DIM          # 32
KW = N_KV * HEAD_DIM             # 16
QKW = QW + KW                    # 48  (q||k width)
QKV_FUSED = 128                  # wq|wk|wq_sw|wk_sw|wv padded to a full vreg width
BS = B * S                       # 16
NEG = -1e9


# ------------------------------- kernel -------------------------------------
def decoder_layer_kernel(x_ref, rope_ref, mask_ref, nw_ref,
                         wqkv_ref, wo_ref, w13_ref, w2_ref, out_ref):
    def rmsnorm(v, w):
        var = jnp.mean(v * v, axis=-1, keepdims=True)
        return v * lax.rsqrt(var + EPS) * w

    x = x_ref[...]                                            # (BS, D) f32

    # ---- attention block -----------------------------------------------
    xn = rmsnorm(x, nw_ref[0:1, :])                           # (BS, D)

    # fused q | k | q_sw | k_sw | v projection (bf16 MXU, f32 accumulate),
    # exactly 128 lanes wide.
    qkv = jnp.dot(xn.astype(jnp.bfloat16), wqkv_ref[...],
                  preferred_element_type=jnp.float32)         # (BS, 128)

    # RoPE on q||k as ONE 48-lane multiply-add; 1/sqrt(head_dim) is baked
    # into the q half of the f32 cos/sin tables.
    rot = qkv[:, :QKW] * rope_ref[0] + qkv[:, QKW:2 * QKW] * rope_ref[1]
    k_rot = rot[:, QW:QKW]                                    # (BS, 16)
    v_all = qkv[:, 2 * QKW:2 * QKW + KW]                      # (BS, 16)

    # One-time head-major stacking: rows become (head, batch, seq).
    q_hm = jnp.concatenate(
        [rot[:, h * HEAD_DIM:(h + 1) * HEAD_DIM] for h in range(N_HEADS)],
        axis=0)                                               # (64, 8)
    k_hm = jnp.concatenate(
        [k_rot[:, g * HEAD_DIM:(g + 1) * HEAD_DIM] for g in range(N_KV)],
        axis=0)                                               # (32, 8)
    v_hm = jnp.concatenate(
        [v_all[:, g * HEAD_DIM:(g + 1) * HEAD_DIM] for g in range(N_KV)],
        axis=0)                                               # (32, 8)

    # ONE score matmul for every (batch, head) pair (q already carries 1/scale).
    s = lax.dot_general(q_hm, k_hm, (((1,), (1,)), ((), ())),
                        preferred_element_type=jnp.float32)   # (64, 32)
    s = s + mask_ref[...]          # causal + cross-batch/cross-kv blocking

    # ONE softmax over the stacked scores (exact divide).
    m = jnp.max(s, axis=-1, keepdims=True)
    e = jnp.exp(s - m)
    p = e / jnp.sum(e, axis=-1, keepdims=True)

    # ONE PV matmul (masked-out blocks contribute 0), then back to token-major
    # layout with vreg-aligned sublane slices + one lane concat.
    pv = jnp.dot(p, v_hm, preferred_element_type=jnp.float32)     # (64, 8)
    y = jnp.concatenate([pv[h * BS:(h + 1) * BS, :] for h in range(N_HEADS)],
                        axis=1)                                   # (BS, 32)

    attn_out = jnp.dot(y.astype(jnp.bfloat16), wo_ref[...],
                       preferred_element_type=jnp.float32)        # (BS, D)
    h1 = x + attn_out

    # ---- feed-forward block ----------------------------------------------
    hn = rmsnorm(h1, nw_ref[1:2, :])
    gu = jnp.dot(hn.astype(jnp.bfloat16), w13_ref[...],
                 preferred_element_type=jnp.float32)              # (BS, 128)
    act = jax.nn.silu(gu[:, :HIDDEN]) * gu[:, HIDDEN:]
    ffn = jnp.dot(act.astype(jnp.bfloat16), w2_ref[...],
                  preferred_element_type=jnp.float32)             # (BS, D)

    # single lane-dense fused output slab: out || k_rot || v
    out_ref[...] = jnp.concatenate([h1 + ffn, k_rot, v_all], axis=1)


# ------------------------------- wrapper -------------------------------------
@jax.jit
def llama_decoder_layer(x, freqs_cos, freqs_sin, atten_mask, params):
    (anw, wq_t, wk_t, wv_t, wo_t, fnw, w1_t, w3_t, w2_t) = params

    # --- fused / reordered weights (pure JAX, done once) ---------------------
    def swap_halves(w, n_heads):
        # per-head column swap of the two RoPE halves: [r|i] -> [i|r]
        return (w.reshape(D, n_heads, 2, HEAD_DIM // 2)[:, :, ::-1, :]
                 .reshape(D, n_heads * HEAD_DIM))

    wq_sw = swap_halves(wq_t, N_HEADS)
    wk_sw = swap_halves(wk_t, N_KV)
    pad = jnp.zeros((D, QKV_FUSED - (2 * QW + 3 * KW)), jnp.float32)
    # layout: [wq | wk | wq_sw | wk_sw | wv | pad]  ->  (D, 128)
    w_qkv = jnp.concatenate([wq_t, wk_t, wq_sw, wk_sw, wv_t, pad],
                            axis=1).astype(jnp.bfloat16)
    w13 = jnp.concatenate([w1_t, w3_t], axis=1).astype(jnp.bfloat16)  # (D, 128)
    wo_b = wo_t.astype(jnp.bfloat16)
    w2_b = w2_t.astype(jnp.bfloat16)

    # --- fused RoPE table (B*S, 48) x {cos, sin}; 1/sqrt(hd) folded into the
    # q portion (kept in f32 so the bf16 weights stay un-rescaled). -----------
    cos_h = jnp.concatenate([freqs_cos, freqs_cos], axis=-1)        # (S, hd)
    sin_h = jnp.concatenate([-freqs_sin, freqs_sin], axis=-1)       # (S, hd)
    cos_qk = jnp.concatenate([jnp.tile(cos_h, (1, N_HEADS)) / SCALE,
                              jnp.tile(cos_h, (1, N_KV))], axis=1)  # (S, 48)
    sin_qk = jnp.concatenate([jnp.tile(sin_h, (1, N_HEADS)) / SCALE,
                              jnp.tile(sin_h, (1, N_KV))], axis=1)  # (S, 48)
    rope_tab = jnp.stack([jnp.tile(cos_qk, (B, 1)),
                          jnp.tile(sin_qk, (B, 1))], axis=0)        # (2, BS, 48)

    # --- fused attention mask for the stacked (head,batch,seq) score layout --
    # rows: h*B*S + b*S + s ; cols: g*B*S + b2*S + t
    row_blocks = []
    for h in range(N_HEADS):
        for b in range(B):
            col_blocks = []
            for g in range(N_KV):
                for b2 in range(B):
                    if b2 == b and g == h // GROUPS:
                        col_blocks.append(atten_mask)
                    else:
                        col_blocks.append(jnp.full((S, S), NEG, jnp.float32))
            row_blocks.append(jnp.concatenate(col_blocks, axis=1))
    mask_full = jnp.concatenate(row_blocks, axis=0)          # (64, 32)

    nw = jnp.concatenate([anw, fnw], axis=0)                 # (2, D)
    x2d = x.reshape(BS, D)

    OUTW = D + 2 * KW                                        # 64

    grid_spec = pltpu.PrefetchScalarGridSpec(
        num_scalar_prefetch=0,
        grid=(1,),
        in_specs=[
            pl.BlockSpec((BS, D), lambda i: (0, 0)),                 # x
            pl.BlockSpec((2, BS, QKW), lambda i: (0, 0, 0)),         # rope cos|sin
            pl.BlockSpec((N_HEADS * BS, N_KV * BS), lambda i: (0, 0)),  # mask
            pl.BlockSpec((2, D), lambda i: (0, 0)),                  # norm weights
            pl.BlockSpec((D, QKV_FUSED), lambda i: (0, 0)),          # fused qkv(+swap)
            pl.BlockSpec((QW, D), lambda i: (0, 0)),                 # wo
            pl.BlockSpec((D, 2 * HIDDEN), lambda i: (0, 0)),         # w1||w3
            pl.BlockSpec((HIDDEN, D), lambda i: (0, 0)),             # w2
        ],
        out_specs=pl.BlockSpec((BS, OUTW), lambda i: (0, 0)),
    )

    fused = pl.pallas_call(
        decoder_layer_kernel,
        out_shape=jax.ShapeDtypeStruct((BS, OUTW), jnp.float32),
        grid_spec=grid_spec,
        compiler_params=pltpu.CompilerParams(
            dimension_semantics=("arbitrary",)),
    )(x2d, rope_tab, mask_full, nw, w_qkv, wo_b, w13, w2_b)

    # --- split fused output slab; reshape caches to the PyTorch layouts ------
    out = fused[:, :D].reshape(B, S, D)
    k_flat = fused[:, D:D + KW]
    v_flat = fused[:, D + KW:]
    k4 = k_flat.reshape(B, S, N_KV, HEAD_DIM)
    kT = jnp.transpose(k4, (0, 2, 3, 1))                 # (B, KV, hd, S)
    v4 = v_flat.reshape(B, S, N_KV, HEAD_DIM)
    k_list = [kT[:, i] for i in range(N_KV)]             # each (B, hd, S)
    v_list = [v4[:, :, i, :] for i in range(N_KV)]       # each (B, S, hd)
    return out, k_list, v_list


# --------------------------- pure-JAX reference -------------------------------
def reference(x, cos, sin, mask, params):
    (anw, wq_t, wk_t, wv_t, wo_t, fnw, w1_t, w3_t, w2_t) = params

    def rmsnorm(v, w):
        var = jnp.mean(v * v, axis=-1, keepdims=True)
        return v * lax.rsqrt(var + EPS) * w

    def rope(t):  # t: (B, S, H, hd)
        half = HEAD_DIM // 2
        t_r, t_i = t[..., :half], t[..., half:]
        c = cos[None, :, None, :]
        s = sin[None, :, None, :]
        return jnp.concatenate([t_r * c - t_i * s, t_r * s + t_i * c], axis=-1)

    xn = rmsnorm(x, anw[0])
    q = (xn @ wq_t).reshape(B, S, N_HEADS, HEAD_DIM)
    k = (xn @ wk_t).reshape(B, S, N_KV, HEAD_DIM)
    v = (xn @ wv_t).reshape(B, S, N_KV, HEAD_DIM)
    q = rope(q)
    k = jnp.transpose(rope(k), (0, 2, 3, 1))       # (B, KV, hd, S)

    ys = []
    for i in range(N_HEADS):
        ci = i // GROUPS
        attn = jnp.einsum("bsd,bdt->bst", q[:, :, i, :], k[:, ci]) / SCALE + mask
        attn = jax.nn.softmax(attn, axis=-1)
        ys.append(jnp.einsum("bst,btd->bsd", attn, v[:, :, ci, :]))
    y = jnp.concatenate(ys, axis=-1) @ wo_t
    h = x + y
    hn = rmsnorm(h, fnw[0])
    ffn = (jax.nn.silu(hn @ w1_t) * (hn @ w3_t)) @ w2_t
    out = h + ffn
    k_list = [k[:, i] for i in range(N_KV)]
    v_list = [v[:, :, i, :] for i in range(N_KV)]
    return out, k_list, v_list


# --------------------------------- main ---------------------------------------
if __name__ == "__main__":
    key = jax.random.PRNGKey(0)
    keys = jax.random.split(key, 12)

    # deterministic synthetic parameters (linear weights stored (in, out))
    anw = 1.0 + 0.01 * jax.random.normal(keys[0], (1, D), jnp.float32)
    fnw = 1.0 + 0.01 * jax.random.normal(keys[1], (1, D), jnp.float32)
    wq_t = 0.02 * jax.random.normal(keys[2], (D, N_HEADS * HEAD_DIM), jnp.float32)
    wk_t = 0.02 * jax.random.normal(keys[3], (D, N_KV * HEAD_DIM), jnp.float32)
    wv_t = 0.02 * jax.random.normal(keys[4], (D, N_KV * HEAD_DIM), jnp.float32)
    wo_t = 0.02 * jax.random.normal(keys[5], (N_HEADS * HEAD_DIM, D), jnp.float32)
    w1_t = 0.02 * jax.random.normal(keys[6], (D, HIDDEN), jnp.float32)
    w3_t = 0.02 * jax.random.normal(keys[7], (D, HIDDEN), jnp.float32)
    w2_t = 0.02 * jax.random.normal(keys[8], (HIDDEN, D), jnp.float32)
    params = (anw, wq_t, wk_t, wv_t, wo_t, fnw, w1_t, w3_t, w2_t)

    # inputs
    x = jax.random.normal(keys[9], (B, S, D), jnp.float32)

    # RoPE tables (seq, head_dim // 2)
    inv_freq = 1.0 / (10000.0 ** (jnp.arange(0, HEAD_DIM // 2, dtype=jnp.float32)
                                  * 2.0 / HEAD_DIM))
    t = jnp.arange(S, dtype=jnp.float32)
    angles = jnp.outer(t, inv_freq)
    freqs_cos = jnp.cos(angles)
    freqs_sin = jnp.sin(angles)

    # additive causal attention mask (S, S)
    causal = jnp.tril(jnp.ones((S, S), jnp.float32))
    atten_mask = jnp.where(causal == 1, 0.0, NEG).astype(jnp.float32)

    out, k_list, v_list = llama_decoder_layer(x, freqs_cos, freqs_sin,
                                              atten_mask, params)
    jax.block_until_ready(out)

    # correctness check against pure-JAX (f32) reference
    ref_out, ref_k, ref_v = reference(x, freqs_cos, freqs_sin, atten_mask, params)
    assert jnp.allclose(out, ref_out, atol=1e-2, rtol=1e-2), "output mismatch"
    for a, b in zip(k_list, ref_k):
        assert jnp.allclose(a, b, atol=1e-2, rtol=1e-2), "k cache mismatch"
    for a, b in zip(v_list, ref_v):
        assert jnp.allclose(a, b, atol=1e-2, rtol=1e-2), "v cache mismatch"

    print("KERNEL_OK")
</pallas_src>

<mosaic_0001>
module attributes {stable_mosaic.version = 11 : i64} {
  func.func @decoder_layer_kernel(%arg0: i32, %arg1: memref<16x32xf32, #tpu.memory_space<vmem>>, %arg2: memref<2x16x48xf32, #tpu.memory_space<vmem>>, %arg3: memref<64x32xf32, #tpu.memory_space<vmem>>, %arg4: memref<2x32xf32, #tpu.memory_space<vmem>>, %arg5: memref<32x128xbf16, #tpu.memory_space<vmem>>, %arg6: memref<32x32xbf16, #tpu.memory_space<vmem>>, %arg7: memref<32x128xbf16, #tpu.memory_space<vmem>>, %arg8: memref<64x32xbf16, #tpu.memory_space<vmem>>, %arg9: memref<16x64xf32, #tpu.memory_space<vmem>>) attributes {dimension_semantics = [#tpu.dimension_semantics<arbitrary>], iteration_bounds = array<i64: 1>, scalar_prefetch = 0 : i64, scratch_operands = 0 : i64, tpu.core_type = #tpu.core_type<tc>, window_params = [{pipeline_mode = #tpu.pipeline_mode<synchronous>, transform_indices = @transform_0, window_bounds = array<i64: 16, 32>}, {pipeline_mode = #tpu.pipeline_mode<synchronous>, transform_indices = @transform_1, window_bounds = array<i64: 2, 16, 48>}, {pipeline_mode = #tpu.pipeline_mode<synchronous>, transform_indices = @transform_2, window_bounds = array<i64: 64, 32>}, {pipeline_mode = #tpu.pipeline_mode<synchronous>, transform_indices = @transform_3, window_bounds = array<i64: 2, 32>}, {pipeline_mode = #tpu.pipeline_mode<synchronous>, transform_indices = @transform_4, window_bounds = array<i64: 32, 128>}, {pipeline_mode = #tpu.pipeline_mode<synchronous>, transform_indices = @transform_5, window_bounds = array<i64: 32, 32>}, {pipeline_mode = #tpu.pipeline_mode<synchronous>, transform_indices = @transform_6, window_bounds = array<i64: 32, 128>}, {pipeline_mode = #tpu.pipeline_mode<synchronous>, transform_indices = @transform_7, window_bounds = array<i64: 64, 32>}, {pipeline_mode = #tpu.pipeline_mode<synchronous>, transform_indices = @transform_8, window_bounds = array<i64: 16, 64>}]} {
    %c0 = arith.constant 0 : index
    %c0_0 = arith.constant 0 : index
    %0 = vector.load %arg1[%c0, %c0_0] : memref<16x32xf32, #tpu.memory_space<vmem>>, vector<16x32xf32>
    %c0_1 = arith.constant 0 : index
    %c0_2 = arith.constant 0 : index
    %1 = vector.load %arg4[%c0_1, %c0_2] : memref<2x32xf32, #tpu.memory_space<vmem>>, vector<1x32xf32>
    %2 = arith.mulf %0, %0 : vector<16x32xf32>
    %cst = arith.constant dense<0.000000e+00> : vector<16xf32>
    %3 = vector.multi_reduction <add>, %2, %cst [1] : vector<16x32xf32> to vector<16xf32>
    %4 = vector.shape_cast %3 : vector<16xf32> to vector<16x1xf32>
    %cst_3 = arith.constant 3.200000e+01 : f32
    %5 = vector.broadcast %cst_3 : f32 to vector<16x1xf32>
    %6 = arith.divf %4, %5 : vector<16x1xf32>
    %cst_4 = arith.constant 9.99999974E-6 : f32
    %7 = vector.broadcast %cst_4 : f32 to vector<16x1xf32>
    %8 = arith.addf %6, %7 : vector<16x1xf32>
    %9 = math.rsqrt %8 : vector<16x1xf32>
    %10 = vector.broadcast %9 : vector<16x1xf32> to vector<16x32xf32>
    %11 = arith.mulf %0, %10 : vector<16x32xf32>
    %12 = vector.broadcast %1 : vector<1x32xf32> to vector<16x32xf32>
    %13 = arith.mulf %11, %12 : vector<16x32xf32>
    %14 = arith.truncf %13 : vector<16x32xf32> to vector<16x32xbf16>
    %c0_5 = arith.constant 0 : index
    %c0_6 = arith.constant 0 : index
    %15 = vector.load %arg5[%c0_5, %c0_6] : memref<32x128xbf16, #tpu.memory_space<vmem>>, vector<32x128xbf16>
    %cst_7 = arith.constant dense<0.000000e+00> : vector<16x128xf32>
    %16 = tpu.matmul %14, %15, %cst_7 {dimension_numbers = #tpu.dot_dimension_numbers<[1], [0], [0], [1], [0, 0, 1, 1], [], []>} : vector<16x32xbf16>, vector<32x128xbf16>, vector<16x128xf32> -> vector<16x128xf32>
    %17 = vector.extract_strided_slice %16 {offsets = [0, 0], sizes = [16, 48], strides = [1, 1]} : vector<16x128xf32> to vector<16x48xf32>
    %c0_8 = arith.constant 0 : index
    %c0_9 = arith.constant 0 : index
    %c0_10 = arith.constant 0 : index
    %18 = vector.load %arg2[%c0_8, %c0_9, %c0_10] : memref<2x16x48xf32, #tpu.memory_space<vmem>>, vector<1x16x48xf32>
    %19 = vector.shape_cast %18 : vector<1x16x48xf32> to vector<16x48xf32>
    %20 = arith.mulf %17, %19 : vector<16x48xf32>
    %21 = vector.extract_strided_slice %16 {offsets = [0, 48], sizes = [16, 48], strides = [1, 1]} : vector<16x128xf32> to vector<16x48xf32>
    %c1 = arith.constant 1 : index
    %c0_11 = arith.constant 0 : index
    %c0_12 = arith.constant 0 : index
    %22 = vector.load %arg2[%c1, %c0_11, %c0_12] : memref<2x16x48xf32, #tpu.memory_space<vmem>>, vector<1x16x48xf32>
    %23 = vector.shape_cast %22 : vector<1x16x48xf32> to vector<16x48xf32>
    %24 = arith.mulf %21, %23 : vector<16x48xf32>
    %25 = arith.addf %20, %24 : vector<16x48xf32>
    %26 = vector.extract_strided_slice %25 {offsets = [0, 32], sizes = [16, 16], strides = [1, 1]} : vector<16x48xf32> to vector<16x16xf32>
    %27 = vector.extract_strided_slice %16 {offsets = [0, 96], sizes = [16, 16], strides = [1, 1]} : vector<16x128xf32> to vector<16x16xf32>
    %28 = vector.extract_strided_slice %25 {offsets = [0, 0], sizes = [16, 8], strides = [1, 1]} : vector<16x48xf32> to vector<16x8xf32>
    %29 = vector.extract_strided_slice %25 {offsets = [0, 8], sizes = [16, 8], strides = [1, 1]} : vector<16x48xf32> to vector<16x8xf32>
    %30 = vector.extract_strided_slice %25 {offsets = [0, 16], sizes = [16, 8], strides = [1, 1]} : vector<16x48xf32> to vector<16x8xf32>
    %31 = vector.extract_strided_slice %25 {offsets = [0, 24], sizes = [16, 8], strides = [1, 1]} : vector<16x48xf32> to vector<16x8xf32>
    %32 = tpu.concatenate %28, %29, %30, %31 in 0 : vector<16x8xf32>, vector<16x8xf32>, vector<16x8xf32>, vector<16x8xf32> -> vector<64x8xf32>
    %33 = vector.extract_strided_slice %26 {offsets = [0, 0], sizes = [16, 8], strides = [1, 1]} : vector<16x16xf32> to vector<16x8xf32>
    %34 = vector.extract_strided_slice %26 {offsets = [0, 8], sizes = [16, 8], strides = [1, 1]} : vector<16x16xf32> to vector<16x8xf32>
    %35 = tpu.concatenate %33, %34 in 0 : vector<16x8xf32>, vector<16x8xf32> -> vector<32x8xf32>
    %36 = vector.extract_strided_slice %27 {offsets = [0, 0], sizes = [16, 8], strides = [1, 1]} : vector<16x16xf32> to vector<16x8xf32>
    %37 = vector.extract_strided_slice %27 {offsets = [0, 8], sizes = [16, 8], strides = [1, 1]} : vector<16x16xf32> to vector<16x8xf32>
    %38 = tpu.concatenate %36, %37 in 0 : vector<16x8xf32>, vector<16x8xf32> -> vector<32x8xf32>
    %cst_13 = arith.constant dense<0.000000e+00> : vector<64x32xf32>
    %39 = tpu.matmul %32, %35, %cst_13 {dimension_numbers = #tpu.dot_dimension_numbers<[1], [1], [0], [0], [0, 0, 1, 0], [], []>} : vector<64x8xf32>, vector<32x8xf32>, vector<64x32xf32> -> vector<64x32xf32>
    %c0_14 = arith.constant 0 : index
    %c0_15 = arith.constant 0 : index
    %40 = vector.load %arg3[%c0_14, %c0_15] : memref<64x32xf32, #tpu.memory_space<vmem>>, vector<64x32xf32>
    %41 = arith.addf %39, %40 : vector<64x32xf32>
    %cst_16 = arith.constant dense<0xFF800000> : vector<64xf32>
    %42 = vector.multi_reduction <maximumf>, %41, %cst_16 [1] : vector<64x32xf32> to vector<64xf32>
    %43 = vector.shape_cast %42 : vector<64xf32> to vector<64x1xf32>
    %44 = vector.broadcast %43 : vector<64x1xf32> to vector<64x32xf32>
    %45 = arith.subf %41, %44 : vector<64x32xf32>
    %46 = math.exp %45 : vector<64x32xf32>
    %cst_17 = arith.constant dense<0.000000e+00> : vector<64xf32>
    %47 = vector.multi_reduction <add>, %46, %cst_17 [1] : vector<64x32xf32> to vector<64xf32>
    %48 = vector.shape_cast %47 : vector<64xf32> to vector<64x1xf32>
    %49 = vector.broadcast %48 : vector<64x1xf32> to vector<64x32xf32>
    %50 = arith.divf %46, %49 : vector<64x32xf32>
    %cst_18 = arith.constant dense<0.000000e+00> : vector<64x8xf32>
    %51 = tpu.matmul %50, %38, %cst_18 {dimension_numbers = #tpu.dot_dimension_numbers<[1], [0], [0], [1], [0, 0, 1, 1], [], []>} : vector<64x32xf32>, vector<32x8xf32>, vector<64x8xf32> -> vector<64x8xf32>
    %52 = vector.extract_strided_slice %51 {offsets = [0, 0], sizes = [16, 8], strides = [1, 1]} : vector<64x8xf32> to vector<16x8xf32>
    %53 = vector.extract_strided_slice %51 {offsets = [16, 0], sizes = [16, 8], strides = [1, 1]} : vector<64x8xf32> to vector<16x8xf32>
    %54 = vector.extract_strided_slice %51 {offsets = [32, 0], sizes = [16, 8], strides = [1, 1]} : vector<64x8xf32> to vector<16x8xf32>
    %55 = vector.extract_strided_slice %51 {offsets = [48, 0], sizes = [16, 8], strides = [1, 1]} : vector<64x8xf32> to vector<16x8xf32>
    %56 = tpu.concatenate %52, %53, %54, %55 in 1 : vector<16x8xf32>, vector<16x8xf32>, vector<16x8xf32>, vector<16x8xf32> -> vector<16x32xf32>
    %57 = arith.truncf %56 : vector<16x32xf32> to vector<16x32xbf16>
    %c0_19 = arith.constant 0 : index
    %c0_20 = arith.constant 0 : index
    %58 = vector.load %arg6[%c0_19, %c0_20] : memref<32x32xbf16, #tpu.memory_space<vmem>>, vector<32x32xbf16>
    %cst_21 = arith.constant dense<0.000000e+00> : vector<16x32xf32>
    %59 = tpu.matmul %57, %58, %cst_21 {dimension_numbers = #tpu.dot_dimension_numbers<[1], [0], [0], [1], [0, 0, 1, 1], [], []>} : vector<16x32xbf16>, vector<32x32xbf16>, vector<16x32xf32> -> vector<16x32xf32>
    %60 = arith.addf %0, %59 : vector<16x32xf32>
    %c1_22 = arith.constant 1 : index
    %c0_23 = arith.constant 0 : index
    %61 = vector.load %arg4[%c1_22, %c0_23] : memref<2x32xf32, #tpu.memory_space<vmem>>, vector<1x32xf32>
    %62 = arith.mulf %60, %60 : vector<16x32xf32>
    %cst_24 = arith.constant dense<0.000000e+00> : vector<16xf32>
    %63 = vector.multi_reduction <add>, %62, %cst_24 [1] : vector<16x32xf32> to vector<16xf32>
    %64 = vector.shape_cast %63 : vector<16xf32> to vector<16x1xf32>
    %cst_25 = arith.constant 3.200000e+01 : f32
    %65 = vector.broadcast %cst_25 : f32 to vector<16x1xf32>
    %66 = arith.divf %64, %65 : vector<16x1xf32>
    %cst_26 = arith.constant 9.99999974E-6 : f32
    %67 = vector.broadcast %cst_26 : f32 to vector<16x1xf32>
    %68 = arith.addf %66, %67 : vector<16x1xf32>
    %69 = math.rsqrt %68 : vector<16x1xf32>
    %70 = vector.broadcast %69 : vector<16x1xf32> to vector<16x32xf32>
    %71 = arith.mulf %60, %70 : vector<16x32xf32>
    %72 = vector.broadcast %61 : vector<1x32xf32> to vector<16x32xf32>
    %73 = arith.mulf %71, %72 : vector<16x32xf32>
    %74 = arith.truncf %73 : vector<16x32xf32> to vector<16x32xbf16>
    %c0_27 = arith.constant 0 : index
    %c0_28 = arith.constant 0 : index
    %75 = vector.load %arg7[%c0_27, %c0_28] : memref<32x128xbf16, #tpu.memory_space<vmem>>, vector<32x128xbf16>
    %cst_29 = arith.constant dense<0.000000e+00> : vector<16x128xf32>
    %76 = tpu.matmul %74, %75, %cst_29 {dimension_numbers = #tpu.dot_dimension_numbers<[1], [0], [0], [1], [0, 0, 1, 1], [], []>} : vector<16x32xbf16>, vector<32x128xbf16>, vector<16x128xf32> -> vector<16x128xf32>
    %77 = vector.extract_strided_slice %76 {offsets = [0, 0], sizes = [16, 64], strides = [1, 1]} : vector<16x128xf32> to vector<16x64xf32>
    %78 = arith.negf %77 : vector<16x64xf32>
    %79 = math.exp %78 : vector<16x64xf32>
    %cst_30 = arith.constant 1.000000e+00 : f32
    %80 = vector.broadcast %cst_30 : f32 to vector<16x64xf32>
    %81 = arith.addf %80, %79 : vector<16x64xf32>
    %82 = arith.divf %80, %81 : vector<16x64xf32>
    %83 = arith.mulf %77, %82 : vector<16x64xf32>
    %84 = vector.extract_strided_slice %76 {offsets = [0, 64], sizes = [16, 64], strides = [1, 1]} : vector<16x128xf32> to vector<16x64xf32>
    %85 = arith.mulf %83, %84 : vector<16x64xf32>
    %86 = arith.truncf %85 : vector<16x64xf32> to vector<16x64xbf16>
    %c0_31 = arith.constant 0 : index
    %c0_32 = arith.constant 0 : index
    %87 = vector.load %arg8[%c0_31, %c0_32] : memref<64x32xbf16, #tpu.memory_space<vmem>>, vector<64x32xbf16>
    %cst_33 = arith.constant dense<0.000000e+00> : vector<16x32xf32>
    %88 = tpu.matmul %86, %87, %cst_33 {dimension_numbers = #tpu.dot_dimension_numbers<[1], [0], [0], [1], [0, 0, 1, 1], [], []>} : vector<16x64xbf16>, vector<64x32xbf16>, vector<16x32xf32> -> vector<16x32xf32>
    %89 = arith.addf %60, %88 : vector<16x32xf32>
    %90 = tpu.concatenate %89, %26, %27 in 1 : vector<16x32xf32>, vector<16x16xf32>, vector<16x16xf32> -> vector<16x64xf32>
    %c0_34 = arith.constant 0 : index
    %c0_35 = arith.constant 0 : index
    %91 = vector.load %arg9[%c0_34, %c0_35] : memref<16x64xf32, #tpu.memory_space<vmem>>, vector<16x64xf32>
    tpu.vector_store %arg9[%c0_34, %c0_35], %90 {strides = array<i32>} : memref<16x64xf32, #tpu.memory_space<vmem>>, vector<16x64xf32>,
    return
  }
  func.func @transform_0(%arg0: i32) -> (i32, i32) {
    %c0_i32 = arith.constant 0 : i32
    %c0_i32_0 = arith.constant 0 : i32
    %c0_i32_1 = arith.constant 0 : i32
    return %c0_i32, %c0_i32_0 : i32, i32
  }
  func.func @transform_1(%arg0: i32) -> (i32, i32, i32) {
    %c0_i32 = arith.constant 0 : i32
    %c0_i32_0 = arith.constant 0 : i32
    %c0_i32_1 = arith.constant 0 : i32
    %c0_i32_2 = arith.constant 0 : i32
    return %c0_i32, %c0_i32_0, %c0_i32_1 : i32, i32, i32
  }
  func.func @transform_2(%arg0: i32) -> (i32, i32) {
    %c0_i32 = arith.constant 0 : i32
    %c0_i32_0 = arith.constant 0 : i32
    %c0_i32_1 = arith.constant 0 : i32
    return %c0_i32, %c0_i32_0 : i32, i32
  }
  func.func @transform_3(%arg0: i32) -> (i32, i32) {
    %c0_i32 = arith.constant 0 : i32
    %c0_i32_0 = arith.constant 0 : i32
    %c0_i32_1 = arith.constant 0 : i32
    return %c0_i32, %c0_i32_0 : i32, i32
  }
  func.func @transform_4(%arg0: i32) -> (i32, i32) {
    %c0_i32 = arith.constant 0 : i32
    %c0_i32_0 = arith.constant 0 : i32
    %c0_i32_1 = arith.constant 0 : i32
    return %c0_i32, %c0_i32_0 : i32, i32
  }
  func.func @transform_5(%arg0: i32) -> (i32, i32) {
    %c0_i32 = arith.constant 0 : i32
    %c0_i32_0 = arith.constant 0 : i32
    %c0_i32_1 = arith.constant 0 : i32
    return %c0_i32, %c0_i32_0 : i32, i32
  }
  func.func @transform_6(%arg0: i32) -> (i32, i32) {
    %c0_i32 = arith.constant 0 : i32
    %c0_i32_0 = arith.constant 0 : i32
    %c0_i32_1 = arith.constant 0 : i32
    return %c0_i32, %c0_i32_0 : i32, i32
  }
  func.func @transform_7(%arg0: i32) -> (i32, i32) {
    %c0_i32 = arith.constant 0 : i32
    %c0_i32_0 = arith.constant 0 : i32
    %c0_i32_1 = arith.constant 0 : i32
    return %c0_i32, %c0_i32_0 : i32, i32
  }
  func.func @transform_8(%arg0: i32) -> (i32, i32) {
    %c0_i32 = arith.constant 0 : i32
    %c0_i32_0 = arith.constant 0 : i32
    %c0_i32_1 = arith.constant 0 : i32
    return %c0_i32, %c0_i32_0 : i32, i32
  }
}

</mosaic_0001>

<llo_original>
// kernel: tile.39
$region0: #{tile.39}
  %s0 = inlined_call_operand.vmem [shape: f32[8,2,8], index: 0, kind: input, shape index: {}]
  %s1 = inlined_call_operand.vmem [shape: f32[8,16], index: 1, kind: output, shape index: {}]
  $region1: #{tile.39} parent=0
    #allocation0 [shape = 'u8[32768]{0}', space=vmem, size = 0x8000, scoped, tag = 'scoped mem for input reshape']
    %s3 = sshllo.u32 0, 2
    %s4 = smul.addr 2, 7
    %s5 = scalar_lea.vmem %s0, %s4
    %v6 = vld [vmem:[%s5] sm:%s3]
    %s7 = scalar_lea.vmem [#allocation0], 56
    %8 = vst [vmem:[%s7] sm:%s3] %v6
    %s9 = smul.addr 2, 6
    %s10 = scalar_lea.vmem %s0, %s9
    %v11 = vld [vmem:[%s10] sm:%s3]
    %s12 = scalar_lea.vmem [#allocation0], 48
    %13 = vst [vmem:[%s12] sm:%s3] %v11
    %s14 = smul.addr 2, 5
    %s15 = scalar_lea.vmem %s0, %s14
    %v16 = vld [vmem:[%s15] sm:%s3]
    %s17 = scalar_lea.vmem [#allocation0], 40
    %18 = vst [vmem:[%s17] sm:%s3] %v16
    %s19 = smul.addr 2, 4
    %s20 = scalar_lea.vmem %s0, %s19
    %v21 = vld [vmem:[%s20] sm:%s3]
    %s22 = scalar_lea.vmem [#allocation0], 32
    %23 = vst [vmem:[%s22] sm:%s3] %v21
    %s24 = smul.addr 2, 3
    %s25 = scalar_lea.vmem %s0, %s24
    %v26 = vld [vmem:[%s25] sm:%s3]
    %s27 = scalar_lea.vmem [#allocation0], 24
    %28 = vst [vmem:[%s27] sm:%s3] %v26
    %s29 = smul.addr 2, 2
    %s30 = scalar_lea.vmem %s0, %s29
    %v31 = vld [vmem:[%s30] sm:%s3]
    %s32 = scalar_lea.vmem [#allocation0], 16
    %33 = vst [vmem:[%s32] sm:%s3] %v31
    %s34 = scalar_lea.vmem %s0, 2
    %v35 = vld [vmem:[%s34] sm:%s3]
    %s36 = scalar_lea.vmem [#allocation0], 8
    %37 = vst [vmem:[%s36] sm:%s3] %v35
    %v38 = vld [vmem:[%s0] sm:%s3]
    %39 = vst [vmem:[#allocation0] sm:%s3] %v38
    %v40 = vld [vmem:[#allocation0] ss:$8 sm:$0xf]
    %v41 = vld [vmem:[#allocation0] ss:$8 sm:$0xf0]
    %vm42 = vcmask 1047556
    %v43 = vsel %vm42, %v41, %v40
    %vm44 = vcmask 64512
    %45 = vst.msk [vmem:[%s1] sm:$0xff] %vm44, %v43
    %s46 = scalar_lea.vmem [#allocation0], 1
    %v47 = vld [vmem:[%s46] ss:$8 sm:$0xf]
    %s48 = scalar_lea.vmem [#allocation0], 1
    %v49 = vld [vmem:[%s48] ss:$8 sm:$0xf0]
    %vm50 = vcmask 1047556
    %v51 = vsel %vm50, %v49, %v47
    %52 = vrot.lane.b32.xlu0 %v51, 8
    %v53 = vpop.permute.xlu0 %52
    %vm54 = vcmask 130112
    %55 = vst.msk [vmem:[%s1] sm:$0xff] %vm54, %v53

// kernel: neg.1
$region0: #{neg.1}
  #allocation0 [shape = 's32[1]{0}', space=sflag, size = 0x4, scoped, tag = 'scoped memory for neg.1']
  %s0 = inlined_call_operand.vmem [shape: f32[8,4], index: 0, kind: input, shape index: {}]
  %s1 = inlined_call_operand.vmem [shape: f32[8,4], index: 1, kind: output, shape index: {}]
  %v2 = vld [vmem:[%s0] sm:$0xf]
  %3 = xla_tuple %v2
  %4 = xla_tuple %3
  %v5 = vxor.u32 %v2, 2147483648
  %6 = xla_tuple %v5
  %7 = vst [vmem:[%s1] sm:$0xf] %v5

// kernel: llama_decoder_layer.1
$region0: #{llama_decoder_layer.1}
  #allocation0 [shape = 'u32[]', space=smem, size = 0x4, offset = 0x4, fixed_abs, tag = 'smem constant byte address 0x4 - core index']
  #allocation1 [shape = 'u32[144,128]{1,0:T(1,128)}', space=vmem, size = 0x12000, scoped, tag = 'internal scratch']
  %s0 = inlined_call_operand.vmem [shape: f32[16,32], index: 0, kind: input, shape index: {}]
  %s1 = inlined_call_operand.vmem [shape: f32[2,16,48], index: 1, kind: input, shape index: {}]
  %s2 = inlined_call_operand.vmem [shape: f32[64,32], index: 2, kind: input, shape index: {}]
  %s3 = inlined_call_operand.vmem [shape: f32[2,32], index: 3, kind: input, shape index: {}]
  %s4 = inlined_call_operand.vmem [shape: bf16[32,128], index: 4, kind: input, shape index: {}]
  %s5 = inlined_call_operand.vmem [shape: bf16[32,32], index: 5, kind: input, shape index: {}]
  %s6 = inlined_call_operand.vmem [shape: bf16[32,128], index: 6, kind: input, shape index: {}]
  %s7 = inlined_call_operand.vmem [shape: bf16[64,32], index: 7, kind: input, shape index: {}]
  %s8 = inlined_call_operand.vmem [shape: f32[16,64], index: 8, kind: output, shape index: {}]
  %s9 = sld [smem:[#allocation0]]
  $region42: #{llama_decoder_layer.1} parent=0
    _
  %s11 = ssub.s32 1, %s9
  %s12 = scalar_select 0, %s11, %s9
  // Predicated region
  $region2: #{llama_decoder_layer.1} parent=0 // pred_check
    _
  $region3: #{llama_decoder_layer.1} parent=0 // pred_check_branch
    %14 = sbr.rel (0) target = $region5
  $region4: #{llama_decoder_layer.1} parent=0 // pred_region
    _
  $region5: #{llama_decoder_layer.1} parent=0 // pred_fallthru
    _
  // Predicated region
  $region6: #{llama_decoder_layer.1} parent=0 // pred_check
    _
  $region7: #{llama_decoder_layer.1} parent=0 // pred_check_branch
    %16 = sbr.rel (0) target = $region9
  $region8: #{llama_decoder_layer.1} parent=0 // pred_region
    _
  $region9: #{llama_decoder_layer.1} parent=0 // pred_fallthru
    _
  // Predicated region
  $region10: #{llama_decoder_layer.1} parent=0 // pred_check
    _
  $region11: #{llama_decoder_layer.1} parent=0 // pred_check_branch
    %18 = sbr.rel (0) target = $region13
  $region12: #{llama_decoder_layer.1} parent=0 // pred_region
    _
  $region13: #{llama_decoder_layer.1} parent=0 // pred_fallthru
    _
  // Predicated region
  $region14: #{llama_decoder_layer.1} parent=0 // pred_check
    _
  $region15: #{llama_decoder_layer.1} parent=0 // pred_check_branch
    %20 = sbr.rel (0) target = $region17
  $region16: #{llama_decoder_layer.1} parent=0 // pred_region
    _
  $region17: #{llama_decoder_layer.1} parent=0 // pred_fallthru
    _
  // Predicated region
  $region18: #{llama_decoder_layer.1} parent=0 // pred_check
    _
  $region19: #{llama_decoder_layer.1} parent=0 // pred_check_branch
    %22 = sbr.rel (0) target = $region21
  $region20: #{llama_decoder_layer.1} parent=0 // pred_region
    _
  $region21: #{llama_decoder_layer.1} parent=0 // pred_fallthru
    _
  // Predicated region
  $region22: #{llama_decoder_layer.1} parent=0 // pred_check
    _
  $region23: #{llama_decoder_layer.1} parent=0 // pred_check_branch
    %24 = sbr.rel (0) target = $region25
  $region24: #{llama_decoder_layer.1} parent=0 // pred_region
    _
  $region25: #{llama_decoder_layer.1} parent=0 // pred_fallthru
    _
  // Predicated region
  $region26: #{llama_decoder_layer.1} parent=0 // pred_check
    _
  $region27: #{llama_decoder_layer.1} parent=0 // pred_check_branch
    %26 = sbr.rel (0) target = $region29
  $region28: #{llama_decoder_layer.1} parent=0 // pred_region
    _
  $region29: #{llama_decoder_layer.1} parent=0 // pred_fallthru
    _
  // Predicated region
  $region30: #{llama_decoder_layer.1} parent=0 // pred_check
    _
  $region31: #{llama_decoder_layer.1} parent=0 // pred_check_branch
    %28 = sbr.rel (0) target = $region33
  $region32: #{llama_decoder_layer.1} parent=0 // pred_region
    _
  $region33: #{llama_decoder_layer.1} parent=0 // pred_fallthru
    _
  %v30 = vld [vmem:[%s0] sm:$0xff]
  %v31 = vld [vmem:[%s0 + $0x8] sm:$0xff]
  %v32 = vld [vmem:[%s3] sm:$0x1]
  %v33 = vmul.f32 %v30, %v30
  %v34 = vmul.f32 %v31, %v31
  %vm35 = vcmask 261120
  %v36 = vsel %vm35, %v33, 0.0
  %37 = vadd.xlane.f32.xlu0 %v36
  %v38 = vpop.xlane.xlu0 %37
  %v39 = vsel %vm35, %v34, 0.0
  %40 = vadd.xlane.f32.xlu0 %v39
  %v41 = vpop.xlane.xlu0 %40
  %v42 = vrcp.pop 32.0
  %v43 = vmul.f32 %v38, %v42
  %v44 = vmul.f32 %v41, %v42
  %v45 = vadd.f32 %v43, 1e-05
  %v46 = vadd.f32 %v44, 1e-05
  %v47 = vrsqrt.pop %v45
  %v48 = vrsqrt.pop %v46
  %v49 = vmul.f32 %v30, %v47
  %v50 = vmul.f32 %v31, %v48
  %v51 = vlaneseq
  %v52 = vshrl.u32 %v51, 7
  %v53 = vsub.s32 0, %v52
  %v54 = vrot.slane %v32, %v53
  %v55 = vmul.f32 %v49, %v54
  %v56 = vmul.f32 %v50, %v54
  %v57 = vpack.c.bf16 %v56, %v55
  %v58 = vld [vmem:[%s4] sm:$0xf]
  %v59 = vld [vmem:[%s4 + $0x4] sm:$0xf]
  %v60 = vld [vmem:[%s4 + $0x8] sm:$0xf]
  %v61 = vld [vmem:[%s4 + $0xc] sm:$0xf]
  %v66 = vunpack.c.l.b16 %v58
  %v67 = vunpack.c.l.b16 %v59
  %v68 = vunpack.c.l.b16 %v60
  %v69 = vunpack.c.l.b16 %v61
  %v70 = vpack.c.b16 %v67, %v66
  %v71 = vpack.c.b16 %v69, %v68
  %v75 = vsel %vm35, %v57, 0
  %77 = vmatprep.subr.bf16.mxu0 0
  %78 = vmatpush1.bf16.msra.mxu0 %v70
  %79 = vmatprep.subr.bf16.mxu0 0
  %80 = vmatpush1.bf16.msra.mxu0 %v71
  %81 = vmatprep.subr.bf16.mxu0 0
  %82 = vmatpush1.bf16.msra.mxu0 0
  %83 = vmatprep.subr.bf16.mxu0 0
  %84 = vmatpush1.bf16.msra.mxu0 0
  %85 = vmatprep.subr.bf16.mxu0 0
  %86 = vmatpush1.bf16.msra.mxu0 0
  %87 = vmatprep.subr.bf16.mxu0 0
  %88 = vmatpush1.bf16.msra.mxu0 0
  %89 = vmatprep.subr.bf16.mxu0 0
  %90 = vmatpush1.bf16.msra.mxu0 0
  %91 = vmatprep.subr.bf16.mxu0 0
  %92 = vmatpush1.bf16.msra.mxu0 0
  %93 = vmatprep.subr.bf16.mxu0 0
  %94 = vmatpush1.bf16.msra.mxu0 0
  %95 = vmatprep.subr.bf16.mxu0 0
  %96 = vmatpush1.bf16.msra.mxu0 0
  %97 = vmatprep.subr.bf16.mxu0 0
  %98 = vmatpush1.bf16.msra.mxu0 0
  %99 = vmatprep.subr.bf16.mxu0 0
  %100 = vmatpush1.bf16.msra.mxu0 0
  %101 = vmatprep.subr.bf16.mxu0 0
  %102 = vmatpush1.bf16.msra.mxu0 0
  %103 = vmatprep.subr.bf16.mxu0 0
  %104 = vmatpush1.bf16.msra.mxu0 0
  %105 = vmatprep.subr.bf16.mxu0 0
  %106 = vmatpush1.bf16.msra.mxu0 0
  %107 = vmatprep.subr.bf16.mxu0 0
  %108 = vmatpush1.bf16.msra.mxu0 0
  %109 = vmatprep.mubr.bf16.mxu0 0
  %110 = vmatmul.mubr.bf16.gmra.mrb[0].mxu0 %v75
  %v111 = vpop.f32.mrb[0].mxu0
  %v112 = vadd.f32 0.0, %v111
  %v113 = vpop.f32.mrb[0].mxu0
  %v114 = vpop.f32.mrb[0].mxu0
  %v115 = vadd.f32 0.0, %v114
  %v116 = vpop.f32.mrb[0].mxu0
  %117 = vdwg.mxu0
  %v118 = vld [vmem:[%s1] sm:$0xff]
  %v119 = vld [vmem:[%s1 + $0x8] sm:$0xff]
  %v120 = vmul.f32 %v112, %v118
  %v121 = vmul.f32 %v115, %v119
  %s122 = scalar_lea.vmem %s1, 16
  %v123 = vld [vmem:[%s122] sm:$0xff]
  %v124 = vld [vmem:[%s122 + $0x8] sm:$0xff]
  %127 = vrot.lane.b32.xlu0 %v123, 48
  %v128 = vpop.permute.xlu0 %127
  %129 = vrot.lane.b32.xlu0 %v124, 48
  %v130 = vpop.permute.xlu0 %129
  %v133 = vmul.f32 %v112, %v128
  %v134 = vmul.f32 %v115, %v130
  %137 = vrot.lane.b32.xlu0 %v133, 80
  %v138 = vpop.permute.xlu0 %137
  %139 = vrot.lane.b32.xlu0 %v134, 80
  %v140 = vpop.permute.xlu0 %139
  %v143 = vadd.f32 %v120, %v138
  %v144 = vadd.f32 %v121, %v140
  %147 = vrot.lane.b32.xlu0 %v143, 120
  %v148 = vpop.permute.xlu0 %147
  %149 = vrot.lane.b32.xlu0 %v144, 120
  %v150 = vpop.permute.xlu0 %149
  %151 = vrot.lane.b32.xlu0 %v143, 112
  %v152 = vpop.permute.xlu0 %151
  %153 = vrot.lane.b32.xlu0 %v144, 112
  %v154 = vpop.permute.xlu0 %153
  %155 = vrot.lane.b32.xlu0 %v143, 104
  %v156 = vpop.permute.xlu0 %155
  %157 = vrot.lane.b32.xlu0 %v144, 104
  %v158 = vpop.permute.xlu0 %157
  %161 = vrot.lane.b32.xlu0 %v112, 120
  %v162 = vpop.permute.xlu0 %161
  %163 = vrot.lane.b32.xlu0 %v115, 120
  %v164 = vpop.permute.xlu0 %163
  %v165 = vld [vmem:[%s2] sm:$0xff]
  %v166 = vld [vmem:[%s2 + $0x8] sm:$0xff]
  %v167 = vld [vmem:[%s2 + $0x10] sm:$0xff]
  %v168 = vld [vmem:[%s2 + $0x18] sm:$0xff]
  %v169 = vld [vmem:[%s2 + $0x20] sm:$0xff]
  %v170 = vld [vmem:[%s2 + $0x28] sm:$0xff]
  %v171 = vld [vmem:[%s2 + $0x30] sm:$0xff]
  %v172 = vld [vmem:[%s2 + $0x38] sm:$0xff]
  %173 = vrot.lane.b32.xlu0 %v143, 96
  %v174 = vpop.permute.xlu0 %173
  %175 = vrot.lane.b32.xlu0 %v144, 96
  %v176 = vpop.permute.xlu0 %175
  %177 = vrot.lane.b32.xlu0 %v148, 96
  %v178 = vpop.permute.xlu0 %177
  %179 = vrot.lane.b32.xlu0 %v150, 96
  %v180 = vpop.permute.xlu0 %179
  %vm181 = vcmask 64512
  %v182 = vsel %vm181, %v143, 0
  %v184 = vsel %vm181, %v144, 0
  %v186 = vsel %vm181, %v148, 0
  %v188 = vsel %vm181, %v150, 0
  %v190 = vsel %vm181, %v152, 0
  %v192 = vsel %vm181, %v154, 0
  %v194 = vsel %vm181, %v156, 0
  %v196 = vsel %vm181, %v158, 0
  %v198 = vsel %vm181, %v174, 0
  %v200 = vsel %vm181, %v176, 0
  %v202 = vsel %vm181, %v178, 0
  %v204 = vsel %vm181, %v180, 0
  %206 = vmatprep.subr.mxu0 0.0
  %207 = vmatpush1.xpose.msra.mxu0 %v198
  %208 = vmatprep.subr.mxu0 0.0
  %209 = vmatpush1.xpose.msra.mxu0 %v200
  %210 = vmatprep.subr.mxu0 0.0
  %211 = vmatpush1.xpose.msra.mxu0 %v202
  %212 = vmatprep.subr.mxu0 0.0
  %213 = vmatpush1.xpose.msra.mxu0 %v204
  %214 = vmatprep.subr.mxu0 0.0
  %215 = vmatpush1.xpose.msra.mxu0 0.0
  %216 = vmatprep.subr.mxu0 0.0
  %217 = vmatpush1.xpose.msra.mxu0 0.0
  %218 = vmatprep.subr.mxu0 0.0
  %219 = vmatpush1.xpose.msra.mxu0 0.0
  %220 = vmatprep.subr.mxu0 0.0
  %221 = vmatpush1.xpose.msra.mxu0 0.0
  %222 = vmatprep.subr.mxu0 0.0
  %223 = vmatpush1.xpose.msra.mxu0 0.0
  %224 = vmatprep.subr.mxu0 0.0
  %225 = vmatpush1.xpose.msra.mxu0 0.0
  %226 = vmatprep.subr.mxu0 0.0
  %227 = vmatpush1.xpose.msra.mxu0 0.0
  %228 = vmatprep.subr.mxu0 0.0
  %229 = vmatpush1.xpose.msra.mxu0 0.0
  %230 = vmatprep.subr.mxu0 0.0
  %231 = vmatpush1.xpose.msra.mxu0 0.0
  %232 = vmatprep.subr.mxu0 0.0
  %233 = vmatpush1.xpose.msra.mxu0 0.0
  %234 = vmatprep.subr.mxu0 0.0
  %235 = vmatpush1.xpose.msra.mxu0 0.0
  %236 = vmatprep.subr.mxu0 0.0
  %237 = vmatpush1.xpose.msra.mxu0 0.0
  %238 = vmatprep.subr.mxu0 0.0
  %239 = vmatpush1.xpose.msra.mxu0 0.0
  %240 = vmatprep.subr.mxu0 0.0
  %241 = vmatpush1.xpose.msra.mxu0 0.0
  %242 = vmatprep.subr.mxu0 0.0
  %243 = vmatpush1.xpose.msra.mxu0 0.0
  %244 = vmatprep.subr.mxu0 0.0
  %245 = vmatpush1.xpose.msra.mxu0 0.0
  %246 = vmatprep.subr.mxu0 0.0
  %247 = vmatpush1.xpose.msra.mxu0 0.0
  %248 = vmatprep.subr.mxu0 0.0
  %249 = vmatpush1.xpose.msra.mxu0 0.0
  %250 = vmatprep.subr.mxu0 0.0
  %251 = vmatpush1.xpose.msra.mxu0 0.0
  %252 = vmatprep.subr.mxu0 0.0
  %253 = vmatpush1.xpose.msra.mxu0 0.0
  %254 = vmatprep.subr.mxu0 0.0
  %255 = vmatpush1.xpose.msra.mxu0 0.0
  %256 = vmatprep.subr.mxu0 0.0
  %257 = vmatpush1.xpose.msra.mxu0 0.0
  %258 = vmatprep.subr.mxu0 0.0
  %259 = vmatpush1.xpose.msra.mxu0 0.0
  %260 = vmatprep.subr.mxu0 0.0
  %261 = vmatpush1.xpose.msra.mxu0 0.0
  %262 = vmatprep.subr.mxu0 0.0
  %263 = vmatpush1.xpose.msra.mxu0 0.0
  %264 = vmatprep.subr.mxu0 0.0
  %265 = vmatpush1.xpose.msra.mxu0 0.0
  %266 = vmatprep.subr.mxu0 0.0
  %267 = vmatpush1.xpose.msra.mxu0 0.0
  %268 = vmatprep.subr.mxu0 0.0
  %269 = vmatpush1.xpose.msra.mxu0 0.0
  %270 = vmatprep.mubr.f32.mxu0 0.0
  %271 = vmatmul.mubr.f32.gmra.mrb[0].mxu0 %v182
  %v272 = vpop.f32.mrb[0].mxu0
  %v273 = vadd.f32 %v165, %v272
  %v274 = vpop.f32.mrb[0].mxu0
  %275 = vmatprep.mubr.f32.mxu0 0.0
  %276 = vmatmul.mubr.f32.gmra.mrb[0].mxu0 %v184
  %v277 = vpop.f32.mrb[0].mxu0
  %v278 = vadd.f32 %v166, %v277
  %v279 = vpop.f32.mrb[0].mxu0
  %280 = vmatprep.mubr.f32.mxu0 0.0
  %281 = vmatmul.mubr.f32.gmra.mrb[0].mxu0 %v186
  %v282 = vpop.f32.mrb[0].mxu0
  %v283 = vadd.f32 %v167, %v282
  %v284 = vpop.f32.mrb[0].mxu0
  %285 = vmatprep.mubr.f32.mxu0 0.0
  %286 = vmatmul.mubr.f32.gmra.mrb[0].mxu0 %v188
  %v287 = vpop.f32.mrb[0].mxu0
  %v288 = vadd.f32 %v168, %v287
  %v289 = vpop.f32.mrb[0].mxu0
  %290 = vmatprep.mubr.f32.mxu0 0.0
  %291 = vmatmul.mubr.f32.gmra.mrb[0].mxu0 %v190
  %v292 = vpop.f32.mrb[0].mxu0
  %v293 = vadd.f32 %v169, %v292
  %v294 = vpop.f32.mrb[0].mxu0
  %295 = vmatprep.mubr.f32.mxu0 0.0
  %296 = vmatmul.mubr.f32.gmra.mrb[0].mxu0 %v192
  %v297 = vpop.f32.mrb[0].mxu0
  %v298 = vadd.f32 %v170, %v297
  %v299 = vpop.f32.mrb[0].mxu0
  %300 = vmatprep.mubr.f32.mxu0 0.0
  %301 = vmatmul.mubr.f32.gmra.mrb[0].mxu0 %v194
  %v302 = vpop.f32.mrb[0].mxu0
  %v303 = vadd.f32 %v171, %v302
  %v304 = vpop.f32.mrb[0].mxu0
  %305 = vmatprep.mubr.f32.mxu0 0.0
  %306 = vmatmul.mubr.f32.gmra.mrb[0].mxu0 %v196
  %v307 = vpop.f32.mrb[0].mxu0
  %v308 = vadd.f32 %v172, %v307
  %v309 = vpop.f32.mrb[0].mxu0
  %310 = vdwg.mxu0
  %v311 = vsel %vm35, %v273, -inf
  %312 = vmax.xlane.f32.xlu0 %v311
  %v313 = vpop.xlane.xlu0 %312
  %v314 = vsel %vm35, %v278, -inf
  %315 = vmax.xlane.f32.xlu0 %v314
  %v316 = vpop.xlane.xlu0 %315
  %v317 = vsel %vm35, %v283, -inf
  %318 = vmax.xlane.f32.xlu0 %v317
  %v319 = vpop.xlane.xlu0 %318
  %v320 = vsel %vm35, %v288, -inf
  %321 = vmax.xlane.f32.xlu0 %v320
  %v322 = vpop.xlane.xlu0 %321
  %v323 = vsel %vm35, %v293, -inf
  %324 = vmax.xlane.f32.xlu0 %v323
  %v325 = vpop.xlane.xlu0 %324
  %v326 = vsel %vm35, %v298, -inf
  %327 = vmax.xlane.f32.xlu0 %v326
  %v328 = vpop.xlane.xlu0 %327
  %v329 = vsel %vm35, %v303, -inf
  %330 = vmax.xlane.f32.xlu0 %v329
  %v331 = vpop.xlane.xlu0 %330
  %v332 = vsel %vm35, %v308, -inf
  %333 = vmax.xlane.f32.xlu0 %v332
  %v334 = vpop.xlane.xlu0 %333
  %v335 = vsub.f32 %v273, %v313
  %v336 = vsub.f32 %v278, %v316
  %v337 = vsub.f32 %v283, %v319
  %v338 = vsub.f32 %v288, %v322
  %v339 = vsub.f32 %v293, %v325
  %v340 = vsub.f32 %v298, %v328
  %v341 = vsub.f32 %v303, %v331
  %v342 = vsub.f32 %v308, %v334
  %v343 = vmul.f32 %v335, 1.442695
  %v344 = vpow.pop %v343
  %v345 = vmul.f32 %v336, 1.442695
  %v346 = vpow.pop %v345
  %v347 = vmul.f32 %v337, 1.442695
  %v348 = vpow.pop %v347
  %v349 = vmul.f32 %v338, 1.442695
  %v350 = vpow.pop %v349
  %v351 = vmul.f32 %v339, 1.442695
  %v352 = vpow.pop %v351
  %v353 = vmul.f32 %v340, 1.442695
  %v354 = vpow.pop %v353
  %v355 = vmul.f32 %v341, 1.442695
  %v356 = vpow.pop %v355
  %v357 = vmul.f32 %v342, 1.442695
  %v358 = vpow.pop %v357
  %v359 = vsel %vm35, %v344, 0.0
  %360 = vadd.xlane.f32.xlu0 %v359
  %v361 = vpop.xlane.xlu0 %360
  %v362 = vsel %vm35, %v346, 0.0
  %363 = vadd.xlane.f32.xlu0 %v362
  %v364 = vpop.xlane.xlu0 %363
  %v365 = vsel %vm35, %v348, 0.0
  %366 = vadd.xlane.f32.xlu0 %v365
  %v367 = vpop.xlane.xlu0 %366
  %v368 = vsel %vm35, %v350, 0.0
  %369 = vadd.xlane.f32.xlu0 %v368
  %v370 = vpop.xlane.xlu0 %369
  %v371 = vsel %vm35, %v352, 0.0
  %372 = vadd.xlane.f32.xlu0 %v371
  %v373 = vpop.xlane.xlu0 %372
  %v374 = vsel %vm35, %v354, 0.0
  %375 = vadd.xlane.f32.xlu0 %v374
  %v376 = vpop.xlane.xlu0 %375
  %v377 = vsel %vm35, %v356, 0.0
  %378 = vadd.xlane.f32.xlu0 %v377
  %v379 = vpop.xlane.xlu0 %378
  %v380 = vsel %vm35, %v358, 0.0
  %381 = vadd.xlane.f32.xlu0 %v380
  %v382 = vpop.xlane.xlu0 %381
  %v383 = vrcp.pop %v361
  %v384 = vmul.f32 %v344, %v383
  %v385 = vrcp.pop %v364
  %v386 = vmul.f32 %v346, %v385
  %v387 = vrcp.pop %v367
  %v388 = vmul.f32 %v348, %v387
  %v389 = vrcp.pop %v370
  %v390 = vmul.f32 %v350, %v389
  %v391 = vrcp.pop %v373
  %v392 = vmul.f32 %v352, %v391
  %v393 = vrcp.pop %v376
  %v394 = vmul.f32 %v354, %v393
  %v395 = vrcp.pop %v379
  %v396 = vmul.f32 %v356, %v395
  %v397 = vrcp.pop %v382
  %v398 = vmul.f32 %v358, %v397
  %399 = vrot.lane.b32.xlu0 %v112, 32
  %v400 = vpop.permute.xlu0 %399
  %401 = vrot.lane.b32.xlu0 %v115, 32
  %v402 = vpop.permute.xlu0 %401
  %403 = vrot.lane.b32.xlu0 %v162, 32
  %v404 = vpop.permute.xlu0 %403
  %405 = vrot.lane.b32.xlu0 %v164, 32
  %v406 = vpop.permute.xlu0 %405
  %v412 = vsel %vm35, %v384, 0
  %v415 = vsel %vm35, %v386, 0
  %v418 = vsel %vm35, %v388, 0
  %v421 = vsel %vm35, %v390, 0
  %v424 = vsel %vm35, %v392, 0
  %v427 = vsel %vm35, %v394, 0
  %v430 = vsel %vm35, %v396, 0
  %v433 = vsel %vm35, %v398, 0
  %435 = vmatprep.subr.mxu0 0.0
  %436 = vmatpush1.msra.mxu0 %v400
  %437 = vmatprep.subr.mxu0 0.0
  %438 = vmatpush1.msra.mxu0 %v402
  %439 = vmatprep.subr.mxu0 0.0
  %440 = vmatpush1.msra.mxu0 %v404
  %441 = vmatprep.subr.mxu0 0.0
  %442 = vmatpush1.msra.mxu0 %v406
  %443 = vmatprep.subr.mxu0 0.0
  %444 = vmatpush1.msra.mxu0 0.0
  %445 = vmatprep.subr.mxu0 0.0
  %446 = vmatpush1.msra.mxu0 0.0
  %447 = vmatprep.subr.mxu0 0.0
  %448 = vmatpush1.msra.mxu0 0.0
  %449 = vmatprep.subr.mxu0 0.0
  %450 = vmatpush1.msra.mxu0 0.0
  %451 = vmatprep.subr.mxu0 0.0
  %452 = vmatpush1.msra.mxu0 0.0
  %453 = vmatprep.subr.mxu0 0.0
  %454 = vmatpush1.msra.mxu0 0.0
  %455 = vmatprep.subr.mxu0 0.0
  %456 = vmatpush1.msra.mxu0 0.0
  %457 = vmatprep.subr.mxu0 0.0
  %458 = vmatpush1.msra.mxu0 0.0
  %459 = vmatprep.subr.mxu0 0.0
  %460 = vmatpush1.msra.mxu0 0.0
  %461 = vmatprep.subr.mxu0 0.0
  %462 = vmatpush1.msra.mxu0 0.0
  %463 = vmatprep.subr.mxu0 0.0
  %464 = vmatpush1.msra.mxu0 0.0
  %465 = vmatprep.subr.mxu0 0.0
  %466 = vmatpush1.msra.mxu0 0.0
  %467 = vmatprep.subr.mxu0 0.0
  %468 = vmatpush1.msra.mxu0 0.0
  %469 = vmatprep.subr.mxu0 0.0
  %470 = vmatpush1.msra.mxu0 0.0
  %471 = vmatprep.subr.mxu0 0.0
  %472 = vmatpush1.msra.mxu0 0.0
  %473 = vmatprep.subr.mxu0 0.0
  %474 = vmatpush1.msra.mxu0 0.0
  %475 = vmatprep.subr.mxu0 0.0
  %476 = vmatpush1.msra.mxu0 0.0
  %477 = vmatprep.subr.mxu0 0.0
  %478 = vmatpush1.msra.mxu0 0.0
  %479 = vmatprep.subr.mxu0 0.0
  %480 = vmatpush1.msra.mxu0 0.0
  %481 = vmatprep.subr.mxu0 0.0
  %482 = vmatpush1.msra.mxu0 0.0
  %483 = vmatprep.subr.mxu0 0.0
  %484 = vmatpush1.msra.mxu0 0.0
  %485 = vmatprep.subr.mxu0 0.0
  %486 = vmatpush1.msra.mxu0 0.0
  %487 = vmatprep.subr.mxu0 0.0
  %488 = vmatpush1.msra.mxu0 0.0
  %489 = vmatprep.subr.mxu0 0.0
  %490 = vmatpush1.msra.mxu0 0.0
  %491 = vmatprep.subr.mxu0 0.0
  %492 = vmatpush1.msra.mxu0 0.0
  %493 = vmatprep.subr.mxu0 0.0
  %494 = vmatpush1.msra.mxu0 0.0
  %495 = vmatprep.subr.mxu0 0.0
  %496 = vmatpush1.msra.mxu0 0.0
  %497 = vmatprep.subr.mxu0 0.0
  %498 = vmatpush1.msra.mxu0 0.0
  %499 = vmatprep.mubr.f32.mxu0 0.0
  %500 = vmatmul.mubr.f32.gmra.mrb[0].mxu0 %v412
  %v501 = vpop.f32.mrb[0].mxu0
  %v502 = vadd.f32 0.0, %v501
  %v503 = vpop.f32.mrb[0].mxu0
  %504 = vmatprep.mubr.f32.mxu0 0.0
  %505 = vmatmul.mubr.f32.gmra.mrb[0].mxu0 %v415
  %v506 = vpop.f32.mrb[0].mxu0
  %v507 = vadd.f32 0.0, %v506
  %v508 = vpop.f32.mrb[0].mxu0
  %509 = vmatprep.mubr.f32.mxu0 0.0
  %510 = vmatmul.mubr.f32.gmra.mrb[0].mxu0 %v418
  %v511 = vpop.f32.mrb[0].mxu0
  %v512 = vadd.f32 0.0, %v511
  %v513 = vpop.f32.mrb[0].mxu0
  %514 = vmatprep.mubr.f32.mxu0 0.0
  %515 = vmatmul.mubr.f32.gmra.mrb[0].mxu0 %v421
  %v516 = vpop.f32.mrb[0].mxu0
  %v517 = vadd.f32 0.0, %v516
  %v518 = vpop.f32.mrb[0].mxu0
  %519 = vmatprep.mubr.f32.mxu0 0.0
  %520 = vmatmul.mubr.f32.gmra.mrb[0].mxu0 %v424
  %v521 = vpop.f32.mrb[0].mxu0
  %v522 = vadd.f32 0.0, %v521
  %v523 = vpop.f32.mrb[0].mxu0
  %524 = vmatprep.mubr.f32.mxu0 0.0
  %525 = vmatmul.mubr.f32.gmra.mrb[0].mxu0 %v427
  %v526 = vpop.f32.mrb[0].mxu0
  %v527 = vadd.f32 0.0, %v526
  %v528 = vpop.f32.mrb[0].mxu0
  %529 = vmatprep.mubr.f32.mxu0 0.0
  %530 = vmatmul.mubr.f32.gmra.mrb[0].mxu0 %v430
  %v531 = vpop.f32.mrb[0].mxu0
  %v532 = vadd.f32 0.0, %v531
  %v533 = vpop.f32.mrb[0].mxu0
  %534 = vmatprep.mubr.f32.mxu0 0.0
  %535 = vmatmul.mubr.f32.gmra.mrb[0].mxu0 %v433
  %v536 = vpop.f32.mrb[0].mxu0
  %v537 = vadd.f32 0.0, %v536
  %v538 = vpop.f32.mrb[0].mxu0
  %539 = vdwg.mxu0
  %542 = vrot.lane.b32.xlu0 %v512, 8
  %v543 = vpop.permute.xlu0 %542
  %544 = vrot.lane.b32.xlu0 %v517, 8
  %v545 = vpop.permute.xlu0 %544
  %550 = vrot.lane.b32.xlu0 %v522, 16
  %v551 = vpop.permute.xlu0 %550
  %552 = vrot.lane.b32.xlu0 %v527, 16
  %v553 = vpop.permute.xlu0 %552
  %558 = vrot.lane.b32.xlu0 %v532, 24
  %v559 = vpop.permute.xlu0 %558
  %560 = vrot.lane.b32.xlu0 %v537, 24
  %v561 = vpop.permute.xlu0 %560
  %v564 = vsel %vm181, %v502, %v543
  %v565 = vsel %vm181, %v507, %v545
  %vm566 = vcmask 130048
  %v567 = vsel %vm566, %v564, %v551
  %v568 = vsel %vm566, %v565, %v553
  %vm569 = vcmask 195584
  %v570 = vsel %vm569, %v567, %v559
  %v571 = vsel %vm569, %v568, %v561
  %v572 = vpack.c.bf16 %v571, %v570
  %v573 = vld [vmem:[%s5] sm:$0xf]
  %v574 = vld [vmem:[%s5 + $0x4] sm:$0xf]
  %v575 = vld [vmem:[%s5 + $0x8] sm:$0xf]
  %v576 = vld [vmem:[%s5 + $0xc] sm:$0xf]
  %v581 = vunpack.c.l.b16 %v573
  %v582 = vunpack.c.l.b16 %v574
  %v583 = vunpack.c.l.b16 %v575
  %v584 = vunpack.c.l.b16 %v576
  %v585 = vpack.c.b16 %v582, %v581
  %v586 = vpack.c.b16 %v584, %v583
  %v590 = vsel %vm35, %v572, 0
  %592 = vmatprep.subr.bf16.mxu0 0
  %593 = vmatpush1.bf16.msra.mxu0 %v585
  %594 = vmatprep.subr.bf16.mxu0 0
  %595 = vmatpush1.bf16.msra.mxu0 %v586
  %596 = vmatprep.subr.bf16.mxu0 0
  %597 = vmatpush1.bf16.msra.mxu0 0
  %598 = vmatprep.subr.bf16.mxu0 0
  %599 = vmatpush1.bf16.msra.mxu0 0
  %600 = vmatprep.subr.bf16.mxu0 0
  %601 = vmatpush1.bf16.msra.mxu0 0
  %602 = vmatprep.subr.bf16.mxu0 0
  %603 = vmatpush1.bf16.msra.mxu0 0
  %604 = vmatprep.subr.bf16.mxu0 0
  %605 = vmatpush1.bf16.msra.mxu0 0
  %606 = vmatprep.subr.bf16.mxu0 0
  %607 = vmatpush1.bf16.msra.mxu0 0
  %608 = vmatprep.subr.bf16.mxu0 0
  %609 = vmatpush1.bf16.msra.mxu0 0
  %610 = vmatprep.subr.bf16.mxu0 0
  %611 = vmatpush1.bf16.msra.mxu0 0
  %612 = vmatprep.subr.bf16.mxu0 0
  %613 = vmatpush1.bf16.msra.mxu0 0
  %614 = vmatprep.subr.bf16.mxu0 0
  %615 = vmatpush1.bf16.msra.mxu0 0
  %616 = vmatprep.subr.bf16.mxu0 0
  %617 = vmatpush1.bf16.msra.mxu0 0
  %618 = vmatprep.subr.bf16.mxu0 0
  %619 = vmatpush1.bf16.msra.mxu0 0
  %620 = vmatprep.subr.bf16.mxu0 0
  %621 = vmatpush1.bf16.msra.mxu0 0
  %622 = vmatprep.subr.bf16.mxu0 0
  %623 = vmatpush1.bf16.msra.mxu0 0
  %624 = vmatprep.mubr.bf16.mxu0 0
  %625 = vmatmul.mubr.bf16.gmra.mrb[0].mxu0 %v590
  %v626 = vpop.f32.mrb[0].mxu0
  %v627 = vadd.f32 0.0, %v626
  %v628 = vpop.f32.mrb[0].mxu0
  %v629 = vpop.f32.mrb[0].mxu0
  %v630 = vadd.f32 0.0, %v629
  %v631 = vpop.f32.mrb[0].mxu0
  %632 = vdwg.mxu0
  %v633 = vadd.f32 %v30, %v627
  %v634 = vadd.f32 %v31, %v630
  %v635 = vld [vmem:[%s3 + $0x1] sm:$0x1]
  %v636 = vmul.f32 %v633, %v633
  %v637 = vmul.f32 %v634, %v634
  %v638 = vsel %vm35, %v636, 0.0
  %639 = vadd.xlane.f32.xlu0 %v638
  %v640 = vpop.xlane.xlu0 %639
  %v641 = vsel %vm35, %v637, 0.0
  %642 = vadd.xlane.f32.xlu0 %v641
  %v643 = vpop.xlane.xlu0 %642
  %v644 = vmul.f32 %v640, %v42
  %v645 = vmul.f32 %v643, %v42
  %v646 = vadd.f32 %v644, 1e-05
  %v647 = vadd.f32 %v645, 1e-05
  %v648 = vrsqrt.pop %v646
  %v649 = vrsqrt.pop %v647
  %v650 = vmul.f32 %v633, %v648
  %v651 = vmul.f32 %v634, %v649
  %v652 = vlaneseq
  %v653 = vshrl.u32 %v652, 7
  %v654 = vsub.s32 0, %v653
  %v655 = vrot.slane %v635, %v654
  %v656 = vmul.f32 %v650, %v655
  %v657 = vmul.f32 %v651, %v655
  %v658 = vpack.c.bf16 %v657, %v656
  %v659 = vld [vmem:[%s6] sm:$0xf]
  %v660 = vld [vmem:[%s6 + $0x4] sm:$0xf]
  %v661 = vld [vmem:[%s6 + $0x8] sm:$0xf]
  %v662 = vld [vmem:[%s6 + $0xc] sm:$0xf]
  %v667 = vunpack.c.l.b16 %v659
  %v668 = vunpack.c.l.b16 %v660
  %v669 = vunpack.c.l.b16 %v661
  %v670 = vunpack.c.l.b16 %v662
  %v671 = vpack.c.b16 %v668, %v667
  %v672 = vpack.c.b16 %v670, %v669
  %v676 = vsel %vm35, %v658, 0
  %678 = vmatprep.subr.bf16.mxu0 0
  %679 = vmatpush1.bf16.msra.mxu0 %v671
  %680 = vmatprep.subr.bf16.mxu0 0
  %681 = vmatpush1.bf16.msra.mxu0 %v672
  %682 = vmatprep.subr.bf16.mxu0 0
  %683 = vmatpush1.bf16.msra.mxu0 0
  %684 = vmatprep.subr.bf16.mxu0 0
  %685 = vmatpush1.bf16.msra.mxu0 0
  %686 = vmatprep.subr.bf16.mxu0 0
  %687 = vmatpush1.bf16.msra.mxu0 0
  %688 = vmatprep.subr.bf16.mxu0 0
  %689 = vmatpush1.bf16.msra.mxu0 0
  %690 = vmatprep.subr.bf16.mxu0 0
  %691 = vmatpush1.bf16.msra.mxu0 0
  %692 = vmatprep.subr.bf16.mxu0 0
  %693 = vmatpush1.bf16.msra.mxu0 0
  %694 = vmatprep.subr.bf16.mxu0 0
  %695 = vmatpush1.bf16.msra.mxu0 0
  %696 = vmatprep.subr.bf16.mxu0 0
  %697 = vmatpush1.bf16.msra.mxu0 0
  %698 = vmatprep.subr.bf16.mxu0 0
  %699 = vmatpush1.bf16.msra.mxu0 0
  %700 = vmatprep.subr.bf16.mxu0 0
  %701 = vmatpush1.bf16.msra.mxu0 0
  %702 = vmatprep.subr.bf16.mxu0 0
  %703 = vmatpush1.bf16.msra.mxu0 0
  %704 = vmatprep.subr.bf16.mxu0 0
  %705 = vmatpush1.bf16.msra.mxu0 0
  %706 = vmatprep.subr.bf16.mxu0 0
  %707 = vmatpush1.bf16.msra.mxu0 0
  %708 = vmatprep.subr.bf16.mxu0 0
  %709 = vmatpush1.bf16.msra.mxu0 0
  %710 = vmatprep.mubr.bf16.mxu0 0
  %711 = vmatmul.mubr.bf16.gmra.mrb[0].mxu0 %v676
  %v712 = vpop.f32.mrb[0].mxu0
  %v713 = vadd.f32 0.0, %v712
  %v714 = vpop.f32.mrb[0].mxu0
  %v715 = vpop.f32.mrb[0].mxu0
  %v716 = vadd.f32 0.0, %v715
  %v717 = vpop.f32.mrb[0].mxu0
  %718 = vdwg.mxu0
  %v719 = vxor.u32 %v713, 2147483648
  %v720 = vxor.u32 %v716, 2147483648
  %v721 = vmul.f32 %v719, 1.442695
  %v722 = vpow.pop %v721
  %v723 = vmul.f32 %v720, 1.442695
  %v724 = vpow.pop %v723
  %v725 = vadd.f32 %v722, 1.0
  %v726 = vadd.f32 %v724, 1.0
  %v727 = vrcp.pop %v725
  %v728 = vmul.f32 1.0, %v727
  %v729 = vrcp.pop %v726
  %v730 = vmul.f32 1.0, %v729
  %v731 = vmul.f32 %v713, %v728
  %v732 = vmul.f32 %v716, %v730
  %735 = vrot.lane.b32.xlu0 %v713, 64
  %v736 = vpop.permute.xlu0 %735
  %737 = vrot.lane.b32.xlu0 %v716, 64
  %v738 = vpop.permute.xlu0 %737
  %v741 = vmul.f32 %v731, %v736
  %v742 = vmul.f32 %v732, %v738
  %v743 = vpack.c.bf16 %v742, %v741
  %v744 = vld [vmem:[%s7] sm:$0xf]
  %v745 = vld [vmem:[%s7 + $0x4] sm:$0xf]
  %v746 = vld [vmem:[%s7 + $0x8] sm:$0xf]
  %v747 = vld [vmem:[%s7 + $0xc] sm:$0xf]
  %v748 = vld [vmem:[%s7 + $0x10] sm:$0xf]
  %v749 = vld [vmem:[%s7 + $0x14] sm:$0xf]
  %v750 = vld [vmem:[%s7 + $0x18] sm:$0xf]
  %v751 = vld [vmem:[%s7 + $0x1c] sm:$0xf]
  %v760 = vunpack.c.l.b16 %v744
  %v761 = vunpack.c.l.b16 %v745
  %v762 = vunpack.c.l.b16 %v746
  %v763 = vunpack.c.l.b16 %v747
  %v764 = vunpack.c.l.b16 %v748
  %v765 = vunpack.c.l.b16 %v749
  %v766 = vunpack.c.l.b16 %v750
  %v767 = vunpack.c.l.b16 %v751
  %v768 = vpack.c.b16 %v761, %v760
  %v769 = vpack.c.b16 %v763, %v762
  %v770 = vpack.c.b16 %v765, %v764
  %v771 = vpack.c.b16 %v767, %v766
  %vm776 = vcmask 523264
  %v778 = vsel %vm776, %v743, 0
  %780 = vmatprep.subr.bf16.mxu0 0
  %781 = vmatpush1.bf16.msra.mxu0 %v768
  %782 = vmatprep.subr.bf16.mxu0 0
  %783 = vmatpush1.bf16.msra.mxu0 %v769
  %784 = vmatprep.subr.bf16.mxu0 0
  %785 = vmatpush1.bf16.msra.mxu0 %v770
  %786 = vmatprep.subr.bf16.mxu0 0
  %787 = vmatpush1.bf16.msra.mxu0 %v771
  %788 = vmatprep.subr.bf16.mxu0 0
  %789 = vmatpush1.bf16.msra.mxu0 0
  %790 = vmatprep.subr.bf16.mxu0 0
  %791 = vmatpush1.bf16.msra.mxu0 0
  %792 = vmatprep.subr.bf16.mxu0 0
  %793 = vmatpush1.bf16.msra.mxu0 0
  %794 = vmatprep.subr.bf16.mxu0 0
  %795 = vmatpush1.bf16.msra.mxu0 0
  %796 = vmatprep.subr.bf16.mxu0 0
  %797 = vmatpush1.bf16.msra.mxu0 0
  %798 = vmatprep.subr.bf16.mxu0 0
  %799 = vmatpush1.bf16.msra.mxu0 0
  %800 = vmatprep.subr.bf16.mxu0 0
  %801 = vmatpush1.bf16.msra.mxu0 0
  %802 = vmatprep.subr.bf16.mxu0 0
  %803 = vmatpush1.bf16.msra.mxu0 0
  %804 = vmatprep.subr.bf16.mxu0 0
  %805 = vmatpush1.bf16.msra.mxu0 0
  %806 = vmatprep.subr.bf16.mxu0 0
  %807 = vmatpush1.bf16.msra.mxu0 0
  %808 = vmatprep.subr.bf16.mxu0 0
  %809 = vmatpush1.bf16.msra.mxu0 0
  %810 = vmatprep.subr.bf16.mxu0 0
  %811 = vmatpush1.bf16.msra.mxu0 0
  %812 = vmatprep.mubr.bf16.mxu0 0
  %813 = vmatmul.mubr.bf16.gmra.mrb[0].mxu0 %v778
  %v814 = vpop.f32.mrb[0].mxu0
  %v815 = vadd.f32 0.0, %v814
  %v816 = vpop.f32.mrb[0].mxu0
  %v817 = vpop.f32.mrb[0].mxu0
  %v818 = vadd.f32 0.0, %v817
  %v819 = vpop.f32.mrb[0].mxu0
  %820 = vdwg.mxu0
  %v821 = vadd.f32 %v633, %v815
  %v822 = vadd.f32 %v634, %v818
  %823 = vrot.lane.b32.xlu0 %v112, 80
  %v824 = vpop.permute.xlu0 %823
  %825 = vrot.lane.b32.xlu0 %v115, 80
  %v826 = vpop.permute.xlu0 %825
  %v829 = vsel %vm35, %v821, %v143
  %v830 = vsel %vm35, %v822, %v144
  %vm831 = vcmask 392192
  %v832 = vsel %vm831, %v829, %v824
  %v833 = vsel %vm831, %v830, %v826
  %834 = vst.msk [vmem:[%s8] sm:$0xff] %vm776, %v832
  %835 = vst.msk [vmem:[%s8 + $0x8] sm:$0xff] %vm776, %v833
  // Predicated region
  $region34: #{llama_decoder_layer.1} parent=0 // pred_check
    _
  $region35: #{llama_decoder_layer.1} parent=0 // pred_check_branch
    %837 = sbr.rel (0) target = $region37
  $region36: #{llama_decoder_layer.1} parent=0 // pred_region
    _
  $region37: #{llama_decoder_layer.1} parent=0 // pred_fallthru
    _
  // Predicated region
  $region38: #{llama_decoder_layer.1} parent=0 // pred_check
    _
  $region39: #{llama_decoder_layer.1} parent=0 // pred_check_branch
    %839 = sbr.rel (0) target = $region41
  $region40: #{llama_decoder_layer.1} parent=0 // pred_region
    _
  $region41: #{llama_decoder_layer.1} parent=0 // pred_fallthru
    _

</llo_original>
